<compile_context>
chip_gen: v7x
topology: tpu7x:2x2x1
jax: 0.10.0
libtpu: 0.0.40
codegen_flags: <defaults>
</compile_context>

<pallas_src>
import functools

import jax
import jax.numpy as jnp
from jax.experimental import pallas as pl
from jax.experimental.pallas import tpu as pltpu

_MM_DTYPE = jnp.bfloat16   # MXU input dtype (weights + casted activations)
_LANE = 128                # lane width
_SUBLANE = 8               # sublane width


def _round_up(n, m):
    return ((n + m - 1) // m) * m


def _pad_to(a, target_shape):
    pads = [(0, t - s) for s, t in zip(a.shape, target_shape)]
    return jnp.pad(a, pads)


def _leaky_relu(x, slope=0.01):
    # torch.nn.functional.leaky_relu default negative_slope = 0.01
    return jnp.where(x >= 0, x, slope * x)


def _mlp_kernel(x_ref, w_in_ref, b_in_ref, w_h_ref, b_h_ref, w_out_ref, b_out_ref,
                o_ref, *, hidden_layer_count):
    # Input layer: bf16 x bf16 -> f32 accumulate; bias + leaky_relu in f32.
    h = jnp.dot(x_ref[...], w_in_ref[...], preferred_element_type=jnp.float32)
    h = _leaky_relu(h + b_in_ref[...])

    # Hidden layers. Static unroll is fine at small hidden_layer_count;
    # TODO(synk): switch to lax.fori_loop(..., unroll=True) with dynamic
    # w_h_ref[i] indexing if hidden_layer_count grows large (vreg pressure).
    for i in range(hidden_layer_count):
        h = jnp.dot(h.astype(_MM_DTYPE), w_h_ref[i],
                    preferred_element_type=jnp.float32)
        h = _leaky_relu(h + b_h_ref[i])

    # Output layer (no activation). Lane-dense (TB, out_p) store.
    o = jnp.dot(h.astype(_MM_DTYPE), w_out_ref[...],
                preferred_element_type=jnp.float32)
    o_ref[...] = o + b_out_ref[...]


def prepare_params(params):
    """Zero-pad feature dims to 128 lanes, cast weights to bf16, biases stay f32."""
    w_in, b_in, w_h, b_h, w_out, b_out = params
    in_feat, hidden = w_in.shape
    n_stack = w_h.shape[0]
    out_size = w_out.shape[1]

    in_feat_p = _round_up(in_feat, _LANE)
    hidden_p = _round_up(hidden, _LANE)
    out_p = _round_up(out_size, _LANE)

    w_in_p = _pad_to(w_in, (in_feat_p, hidden_p)).astype(_MM_DTYPE)
    b_in_p = _pad_to(b_in, (1, hidden_p)).astype(jnp.float32)
    w_h_p = _pad_to(w_h, (n_stack, hidden_p, hidden_p)).astype(_MM_DTYPE)
    b_h_p = _pad_to(b_h, (n_stack, 1, hidden_p)).astype(jnp.float32)
    w_out_p = _pad_to(w_out, (hidden_p, out_p)).astype(_MM_DTYPE)
    b_out_p = _pad_to(b_out, (1, out_p)).astype(jnp.float32)

    meta = dict(in_feat=in_feat, in_feat_p=in_feat_p, hidden_p=hidden_p,
                out_size=out_size, out_p=out_p, n_stack=n_stack)
    return (w_in_p, b_in_p, w_h_p, b_h_p, w_out_p, b_out_p), meta


def _choose_batch_tile(batch):
    bp = _round_up(batch, _SUBLANE)
    if bp <= 256:
        return bp, bp              # single grid step
    tb = 256
    return tb, _round_up(bp, tb)   # pipelined / core-parallel batch grid


def one_hot_2d_ff_forward(x, prepared_params, meta, *, hidden_layer_count):
    """x: (batch, seq_len, input_size) float32. Returns (batch, 1, output_size) f32."""
    w_in, b_in, w_h, b_h, w_out, b_out = prepared_params
    batch = x.shape[0]
    in_feat = meta["in_feat"]
    in_feat_p = meta["in_feat_p"]
    hidden_p = meta["hidden_p"]
    out_size = meta["out_size"]
    out_p = meta["out_p"]
    n_stack = meta["n_stack"]

    tb, batch_p = _choose_batch_tile(batch)

    # Glue: flatten like torch.flatten(x, start_dim=1); pad rows/lanes; bf16 for MXU.
    xf = x.reshape(batch, -1).astype(jnp.float32)
    assert xf.shape[1] == in_feat
    xf = _pad_to(xf, (batch_p, in_feat_p)).astype(_MM_DTYPE)

    kernel = functools.partial(_mlp_kernel, hidden_layer_count=hidden_layer_count)

    out_padded = pl.pallas_call(
        kernel,
        out_shape=jax.ShapeDtypeStruct((batch_p, out_p), jnp.float32),
        grid=(batch_p // tb,),
        in_specs=[
            # Activations: tiled along batch, pipelined across grid steps.
            pl.BlockSpec((tb, in_feat_p), lambda i: (i, 0)),
            # Weights / biases: same block every step -> stay resident in VMEM.
            pl.BlockSpec((in_feat_p, hidden_p), lambda i: (0, 0)),
            pl.BlockSpec((1, hidden_p), lambda i: (0, 0)),
            pl.BlockSpec((n_stack, hidden_p, hidden_p), lambda i: (0, 0, 0)),
            pl.BlockSpec((n_stack, 1, hidden_p), lambda i: (0, 0, 0)),
            pl.BlockSpec((hidden_p, out_p), lambda i: (0, 0)),
            pl.BlockSpec((1, out_p), lambda i: (0, 0)),
        ],
        out_specs=pl.BlockSpec((tb, out_p), lambda i: (i, 0)),
        compiler_params=pltpu.CompilerParams(
            dimension_semantics=("parallel",)),
    )(xf, w_in, b_in, w_h, b_h, w_out, b_out)

    # Slice padding away; match PyTorch: self._output_layer(x)[:, None, :]
    return out_padded[:batch, :out_size][:, None, :]


def init_params(key, *, input_size, seq_len, hidden_layer_size, hidden_layer_count,
                output_size):
    """Deterministic synthetic params at module-natural shapes. Weights are (in, out)."""
    in_feat = input_size * seq_len
    k = jax.random.split(key, 6)
    w_in = jax.random.normal(k[0], (in_feat, hidden_layer_size), jnp.float32) * 0.1
    b_in = jax.random.normal(k[1], (1, hidden_layer_size), jnp.float32) * 0.1
    w_h = jax.random.normal(
        k[2], (max(hidden_layer_count, 1), hidden_layer_size, hidden_layer_size),
        jnp.float32) * 0.1
    b_h = jax.random.normal(
        k[3], (max(hidden_layer_count, 1), 1, hidden_layer_size), jnp.float32) * 0.1
    w_out = jax.random.normal(k[4], (hidden_layer_size, output_size), jnp.float32) * 0.1
    b_out = jax.random.normal(k[5], (1, output_size), jnp.float32) * 0.1
    return (w_in, b_in, w_h, b_h, w_out, b_out)


def reference_forward(x, params, *, hidden_layer_count):
    """Pure-JAX reference mirroring the kernel's bf16-weight / f32-accumulate math."""
    w_in, b_in, w_h, b_h, w_out, b_out = params
    xf = x.reshape(x.shape[0], -1)
    h = jnp.dot(xf.astype(_MM_DTYPE), w_in.astype(_MM_DTYPE),
                preferred_element_type=jnp.float32)
    h = _leaky_relu(h + b_in)
    for i in range(hidden_layer_count):
        h = jnp.dot(h.astype(_MM_DTYPE), w_h[i].astype(_MM_DTYPE),
                    preferred_element_type=jnp.float32)
        h = _leaky_relu(h + b_h[i])
    o = jnp.dot(h.astype(_MM_DTYPE), w_out.astype(_MM_DTYPE),
                preferred_element_type=jnp.float32) + b_out
    return o[:, None, :]


if __name__ == "__main__":
    # Small, module-consistent shapes
    batch = 2
    seq_len = 8
    input_size = 4
    hidden_layer_size = 32
    hidden_layer_count = 2
    output_size = 6

    key = jax.random.PRNGKey(0)
    kx, kp = jax.random.split(key)
    x = jax.random.normal(kx, (batch, seq_len, input_size), jnp.float32)
    params = init_params(
        kp,
        input_size=input_size,
        seq_len=seq_len,
        hidden_layer_size=hidden_layer_size,
        hidden_layer_count=hidden_layer_count,
        output_size=output_size,
    )

    prepared, meta = prepare_params(params)
    out = one_hot_2d_ff_forward(x, prepared, meta,
                                hidden_layer_count=hidden_layer_count)
    out = jax.block_until_ready(out)

    ref = reference_forward(x, params, hidden_layer_count=hidden_layer_count)
    assert out.shape == (batch, 1, output_size), out.shape
    err = float(jnp.max(jnp.abs(out - ref)))
    assert jnp.allclose(out, ref, atol=2e-3, rtol=2e-3), err

    print("KERNEL_OK")
</pallas_src>

<mosaic_0001>
module attributes {stable_mosaic.version = 11 : i64} {
  func.func @_mlp_kernel(%arg0: i32, %arg1: memref<8x128xbf16, #tpu.memory_space<vmem>>, %arg2: memref<128x128xbf16, #tpu.memory_space<vmem>>, %arg3: memref<1x128xf32, #tpu.memory_space<vmem>>, %arg4: memref<2x128x128xbf16, #tpu.memory_space<vmem>>, %arg5: memref<2x1x128xf32, #tpu.memory_space<vmem>>, %arg6: memref<128x128xbf16, #tpu.memory_space<vmem>>, %arg7: memref<1x128xf32, #tpu.memory_space<vmem>>, %arg8: memref<8x128xf32, #tpu.memory_space<vmem>>) attributes {dimension_semantics = [#tpu.dimension_semantics<parallel>], iteration_bounds = array<i64: 1>, scalar_prefetch = 0 : i64, scratch_operands = 0 : i64, tpu.core_type = #tpu.core_type<tc>, window_params = [{transform_indices = @transform_0, window_bounds = array<i64: 8, 128>}, {pipeline_mode = #tpu.pipeline_mode<synchronous>, transform_indices = @transform_1, window_bounds = array<i64: 128, 128>}, {pipeline_mode = #tpu.pipeline_mode<synchronous>, transform_indices = @transform_2, window_bounds = array<i64: 1, 128>}, {pipeline_mode = #tpu.pipeline_mode<synchronous>, transform_indices = @transform_3, window_bounds = array<i64: 2, 128, 128>}, {pipeline_mode = #tpu.pipeline_mode<synchronous>, transform_indices = @transform_4, window_bounds = array<i64: 2, 1, 128>}, {pipeline_mode = #tpu.pipeline_mode<synchronous>, transform_indices = @transform_5, window_bounds = array<i64: 128, 128>}, {pipeline_mode = #tpu.pipeline_mode<synchronous>, transform_indices = @transform_6, window_bounds = array<i64: 1, 128>}, {transform_indices = @transform_7, window_bounds = array<i64: 8, 128>}]} {
    %c0 = arith.constant 0 : index
    %c0_0 = arith.constant 0 : index
    %0 = vector.load %arg1[%c0, %c0_0] : memref<8x128xbf16, #tpu.memory_space<vmem>>, vector<8x128xbf16>
    %c0_1 = arith.constant 0 : index
    %c0_2 = arith.constant 0 : index
    %1 = vector.load %arg2[%c0_1, %c0_2] : memref<128x128xbf16, #tpu.memory_space<vmem>>, vector<128x128xbf16>
    %cst = arith.constant dense<0.000000e+00> : vector<8x128xf32>
    %2 = tpu.matmul %0, %1, %cst {dimension_numbers = #tpu.dot_dimension_numbers<[1], [0], [0], [1], [0, 0, 1, 1], [], []>} : vector<8x128xbf16>, vector<128x128xbf16>, vector<8x128xf32> -> vector<8x128xf32>
    %c0_3 = arith.constant 0 : index
    %c0_4 = arith.constant 0 : index
    %3 = vector.load %arg3[%c0_3, %c0_4] : memref<1x128xf32, #tpu.memory_space<vmem>>, vector<1x128xf32>
    %4 = vector.broadcast %3 : vector<1x128xf32> to vector<8x128xf32>
    %5 = arith.addf %2, %4 : vector<8x128xf32>
    %cst_5 = arith.constant 0.000000e+00 : f32
    %6 = vector.broadcast %cst_5 : f32 to vector<8x128xf32>
    %7 = arith.cmpf oge, %5, %6 : vector<8x128xf32>
    %cst_6 = arith.constant 0.00999999977 : f32
    %8 = vector.broadcast %cst_6 : f32 to vector<8x128xf32>
    %9 = arith.mulf %8, %5 : vector<8x128xf32>
    %10 = arith.select %7, %5, %9 : vector<8x128xi1>, vector<8x128xf32>
    %11 = arith.truncf %10 : vector<8x128xf32> to vector<8x128xbf16>
    %c0_7 = arith.constant 0 : index
    %c0_8 = arith.constant 0 : index
    %c0_9 = arith.constant 0 : index
    %12 = vector.load %arg4[%c0_7, %c0_8, %c0_9] : memref<2x128x128xbf16, #tpu.memory_space<vmem>>, vector<1x128x128xbf16>
    %13 = vector.shape_cast %12 : vector<1x128x128xbf16> to vector<128x128xbf16>
    %cst_10 = arith.constant dense<0.000000e+00> : vector<8x128xf32>
    %14 = tpu.matmul %11, %13, %cst_10 {dimension_numbers = #tpu.dot_dimension_numbers<[1], [0], [0], [1], [0, 0, 1, 1], [], []>} : vector<8x128xbf16>, vector<128x128xbf16>, vector<8x128xf32> -> vector<8x128xf32>
    %c0_11 = arith.constant 0 : index
    %c0_12 = arith.constant 0 : index
    %c0_13 = arith.constant 0 : index
    %15 = vector.load %arg5[%c0_11, %c0_12, %c0_13] : memref<2x1x128xf32, #tpu.memory_space<vmem>>, vector<1x1x128xf32>
    %16 = vector.shape_cast %15 : vector<1x1x128xf32> to vector<1x128xf32>
    %17 = vector.broadcast %16 : vector<1x128xf32> to vector<8x128xf32>
    %18 = arith.addf %14, %17 : vector<8x128xf32>
    %cst_14 = arith.constant 0.000000e+00 : f32
    %19 = vector.broadcast %cst_14 : f32 to vector<8x128xf32>
    %20 = arith.cmpf oge, %18, %19 : vector<8x128xf32>
    %cst_15 = arith.constant 0.00999999977 : f32
    %21 = vector.broadcast %cst_15 : f32 to vector<8x128xf32>
    %22 = arith.mulf %21, %18 : vector<8x128xf32>
    %23 = arith.select %20, %18, %22 : vector<8x128xi1>, vector<8x128xf32>
    %24 = arith.truncf %23 : vector<8x128xf32> to vector<8x128xbf16>
    %c1 = arith.constant 1 : index
    %c0_16 = arith.constant 0 : index
    %c0_17 = arith.constant 0 : index
    %25 = vector.load %arg4[%c1, %c0_16, %c0_17] : memref<2x128x128xbf16, #tpu.memory_space<vmem>>, vector<1x128x128xbf16>
    %26 = vector.shape_cast %25 : vector<1x128x128xbf16> to vector<128x128xbf16>
    %cst_18 = arith.constant dense<0.000000e+00> : vector<8x128xf32>
    %27 = tpu.matmul %24, %26, %cst_18 {dimension_numbers = #tpu.dot_dimension_numbers<[1], [0], [0], [1], [0, 0, 1, 1], [], []>} : vector<8x128xbf16>, vector<128x128xbf16>, vector<8x128xf32> -> vector<8x128xf32>
    %c1_19 = arith.constant 1 : index
    %c0_20 = arith.constant 0 : index
    %c0_21 = arith.constant 0 : index
    %28 = vector.load %arg5[%c1_19, %c0_20, %c0_21] : memref<2x1x128xf32, #tpu.memory_space<vmem>>, vector<1x1x128xf32>
    %29 = vector.shape_cast %28 : vector<1x1x128xf32> to vector<1x128xf32>
    %30 = vector.broadcast %29 : vector<1x128xf32> to vector<8x128xf32>
    %31 = arith.addf %27, %30 : vector<8x128xf32>
    %cst_22 = arith.constant 0.000000e+00 : f32
    %32 = vector.broadcast %cst_22 : f32 to vector<8x128xf32>
    %33 = arith.cmpf oge, %31, %32 : vector<8x128xf32>
    %cst_23 = arith.constant 0.00999999977 : f32
    %34 = vector.broadcast %cst_23 : f32 to vector<8x128xf32>
    %35 = arith.mulf %34, %31 : vector<8x128xf32>
    %36 = arith.select %33, %31, %35 : vector<8x128xi1>, vector<8x128xf32>
    %37 = arith.truncf %36 : vector<8x128xf32> to vector<8x128xbf16>
    %c0_24 = arith.constant 0 : index
    %c0_25 = arith.constant 0 : index
    %38 = vector.load %arg6[%c0_24, %c0_25] : memref<128x128xbf16, #tpu.memory_space<vmem>>, vector<128x128xbf16>
    %cst_26 = arith.constant dense<0.000000e+00> : vector<8x128xf32>
    %39 = tpu.matmul %37, %38, %cst_26 {dimension_numbers = #tpu.dot_dimension_numbers<[1], [0], [0], [1], [0, 0, 1, 1], [], []>} : vector<8x128xbf16>, vector<128x128xbf16>, vector<8x128xf32> -> vector<8x128xf32>
    %c0_27 = arith.constant 0 : index
    %c0_28 = arith.constant 0 : index
    %40 = vector.load %arg7[%c0_27, %c0_28] : memref<1x128xf32, #tpu.memory_space<vmem>>, vector<1x128xf32>
    %41 = vector.broadcast %40 : vector<1x128xf32> to vector<8x128xf32>
    %42 = arith.addf %39, %41 : vector<8x128xf32>
    %c0_29 = arith.constant 0 : index
    %c0_30 = arith.constant 0 : index
    %43 = vector.load %arg8[%c0_29, %c0_30] : memref<8x128xf32, #tpu.memory_space<vmem>>, vector<8x128xf32>
    tpu.vector_store %arg8[%c0_29, %c0_30], %42 {strides = array<i32>} : memref<8x128xf32, #tpu.memory_space<vmem>>, vector<8x128xf32>,
    return
  }
  func.func @transform_0(%arg0: i32) -> (i32, i32) {
    %c0_i32 = arith.constant 0 : i32
    %c0_i32_0 = arith.constant 0 : i32
    return %arg0, %c0_i32 : i32, i32
  }
  func.func @transform_1(%arg0: i32) -> (i32, i32) {
    %c0_i32 = arith.constant 0 : i32
    %c0_i32_0 = arith.constant 0 : i32
    %c0_i32_1 = arith.constant 0 : i32
    return %c0_i32, %c0_i32_0 : i32, i32
  }
  func.func @transform_2(%arg0: i32) -> (i32, i32) {
    %c0_i32 = arith.constant 0 : i32
    %c0_i32_0 = arith.constant 0 : i32
    %c0_i32_1 = arith.constant 0 : i32
    return %c0_i32, %c0_i32_0 : i32, i32
  }
  func.func @transform_3(%arg0: i32) -> (i32, i32, i32) {
    %c0_i32 = arith.constant 0 : i32
    %c0_i32_0 = arith.constant 0 : i32
    %c0_i32_1 = arith.constant 0 : i32
    %c0_i32_2 = arith.constant 0 : i32
    return %c0_i32, %c0_i32_0, %c0_i32_1 : i32, i32, i32
  }
  func.func @transform_4(%arg0: i32) -> (i32, i32, i32) {
    %c0_i32 = arith.constant 0 : i32
    %c0_i32_0 = arith.constant 0 : i32
    %c0_i32_1 = arith.constant 0 : i32
    %c0_i32_2 = arith.constant 0 : i32
    return %c0_i32, %c0_i32_0, %c0_i32_1 : i32, i32, i32
  }
  func.func @transform_5(%arg0: i32) -> (i32, i32) {
    %c0_i32 = arith.constant 0 : i32
    %c0_i32_0 = arith.constant 0 : i32
    %c0_i32_1 = arith.constant 0 : i32
    return %c0_i32, %c0_i32_0 : i32, i32
  }
  func.func @transform_6(%arg0: i32) -> (i32, i32) {
    %c0_i32 = arith.constant 0 : i32
    %c0_i32_0 = arith.constant 0 : i32
    %c0_i32_1 = arith.constant 0 : i32
    return %c0_i32, %c0_i32_0 : i32, i32
  }
  func.func @transform_7(%arg0: i32) -> (i32, i32) {
    %c0_i32 = arith.constant 0 : i32
    %c0_i32_0 = arith.constant 0 : i32
    return %arg0, %c0_i32 : i32, i32
  }
}

</mosaic_0001>

<llo_original>
// kernel: tpu_custom_call.1
$region0: #{tpu_custom_call.1}
  #allocation0 [shape = 'u32[]', space=smem, size = 0x4, offset = 0x4, fixed_abs, tag = 'smem constant byte address 0x4 - core index']
  #allocation1 [shape = 'u32[144,128]{1,0:T(1,128)}', space=vmem, size = 0x12000, scoped, tag = 'internal scratch']
  %s0 = inlined_call_operand.hbm [shape: bf16[8,128], index: 0, kind: input, shape index: {}]
  %s1 = inlined_call_operand.hbm [shape: bf16[128,128], index: 1, kind: input, shape index: {}]
  %s2 = inlined_call_operand.vmem [shape: f32[1,128], index: 2, kind: input, shape index: {}]
  %s3 = inlined_call_operand.hbm [shape: bf16[2,128,128], index: 3, kind: input, shape index: {}]
  %s4 = inlined_call_operand.vmem [shape: f32[2,1,128], index: 4, kind: input, shape index: {}]
  %s5 = inlined_call_operand.hbm [shape: bf16[128,128], index: 5, kind: input, shape index: {}]
  %s6 = inlined_call_operand.vmem [shape: f32[1,128], index: 6, kind: input, shape index: {}]
  %s7 = inlined_call_operand.hbm [shape: f32[8,128], index: 7, kind: output, shape index: {}]
  %s8 = sld [smem:[#allocation0]]
  $region54: #{tpu_custom_call.1} parent=0
    _
  %s10 = ssub.s32 1, %s8
  %s11 = scalar_select 0, %s10, %s8
  $region1: #{tpu_custom_call.1} parent=0
    #allocation2 [shape = 'u8[2048]{0}', space=vmem, size = 0x800, scoped, tag = 'input window, operand 0, single buffered']
    #allocation3 [shape = 's32[1]{0}', space=sflag, size = 0x4, scoped, tag = 'scoped memory for tpu_custom_call.1']
    #allocation4 [shape = 's32[1]{0}', space=sflag, size = 0x4, scoped, tag = 'scoped memory for tpu_custom_call.1']
    #allocation5 [shape = 'u8[32768]{0}', space=vmem, size = 0x8000, scoped, tag = 'input window, operand 1, single buffered']
    #allocation6 [shape = 's32[1]{0}', space=sflag, size = 0x4, scoped, tag = 'scoped memory for tpu_custom_call.1']
    #allocation7 [shape = 'u8[65536]{0}', space=vmem, size = 0x10000, scoped, tag = 'input window, operand 3, single buffered']
    #allocation8 [shape = 'u8[32768]{0}', space=vmem, size = 0x8000, scoped, tag = 'input window, operand 5, single buffered']
    #allocation9 [shape = 's32[1]{0}', space=sflag, size = 0x4, scoped, tag = 'scoped memory for tpu_custom_call.1']
    #allocation10 [shape = 'u8[4096]{0}', space=vmem, size = 0x1000, scoped, tag = 'output window, operand 0, single buffered']
    %12 = vsyncpa [#allocation3], 0
    %13 = vsyncpa [#allocation6], 0
    %14 = vsyncpa [#allocation9], 0
    %15 = vsyncpa [#allocation4], 0
    // Predicated region
    $region2: #{tpu_custom_call.1} parent=1 // pred_check
      _
    $region3: #{tpu_custom_call.1} parent=1 // pred_check_branch
      %17 = sbr.rel (0) target = $region5
    $region4: #{tpu_custom_call.1} parent=1 // pred_region
      %s19 = ssub.s32 64, 64
      %20 = vsyncadd [#allocation3], %s19
      %s22 = sshll.u32 [#allocation2], 4
      %s23 = int_to_ptr.vmem [resolvable:$true] %s22
      %25 = dma.hbm_to_vmem [thread:$0]  %s0, 64, %s23, [#allocation3]
    $region5: #{tpu_custom_call.1} parent=1 // pred_fallthru
      _
    // Predicated region
    $region6: #{tpu_custom_call.1} parent=1 // pred_check
      _
    $region7: #{tpu_custom_call.1} parent=1 // pred_check_branch
      %27 = sbr.rel (0) target = $region9
    $region8: #{tpu_custom_call.1} parent=1 // pred_region
      %s29 = ssub.s32 1024, 1024
      %30 = vsyncadd [#allocation6], %s29
      %s31 = sshll.u32 [#allocation5], 4
      %s32 = int_to_ptr.vmem [resolvable:$true] %s31
      %37 = dma.hbm_to_vmem [thread:$0]  %s1, 1024, %s32, [#allocation6], 64, 64, 4
    $region9: #{tpu_custom_call.1} parent=1 // pred_fallthru
      _
    // Predicated region
    $region10: #{tpu_custom_call.1} parent=1 // pred_check
      _
    $region11: #{tpu_custom_call.1} parent=1 // pred_check_branch
      %39 = sbr.rel (0) target = $region13
    $region12: #{tpu_custom_call.1} parent=1 // pred_region
      _
    $region13: #{tpu_custom_call.1} parent=1 // pred_fallthru
      _
    // Predicated region
    $region14: #{tpu_custom_call.1} parent=1 // pred_check
      _
    $region15: #{tpu_custom_call.1} parent=1 // pred_check_branch
      %41 = sbr.rel (0) target = $region17
    $region16: #{tpu_custom_call.1} parent=1 // pred_region
      %s43 = ssub.s32 2048, 2048
      %44 = vsyncadd [#allocation6], %s43
      %s45 = sshll.u32 [#allocation7], 4
      %s46 = int_to_ptr.vmem [resolvable:$true] %s45
      %51 = dma.hbm_to_vmem [thread:$0]  %s3, 2048, %s46, [#allocation6], 64, 64, 4
    $region17: #{tpu_custom_call.1} parent=1 // pred_fallthru
      _
    // Predicated region
    $region18: #{tpu_custom_call.1} parent=1 // pred_check
      _
    $region19: #{tpu_custom_call.1} parent=1 // pred_check_branch
      %53 = sbr.rel (0) target = $region21
    $region20: #{tpu_custom_call.1} parent=1 // pred_region
      _
    $region21: #{tpu_custom_call.1} parent=1 // pred_fallthru
      _
    // Predicated region
    $region22: #{tpu_custom_call.1} parent=1 // pred_check
      _
    $region23: #{tpu_custom_call.1} parent=1 // pred_check_branch
      %55 = sbr.rel (0) target = $region25
    $region24: #{tpu_custom_call.1} parent=1 // pred_region
      %s57 = ssub.s32 1024, 1024
      %58 = vsyncadd [#allocation9], %s57
      %s59 = sshll.u32 [#allocation8], 4
      %s60 = int_to_ptr.vmem [resolvable:$true] %s59
      %65 = dma.hbm_to_vmem [thread:$0]  %s5, 1024, %s60, [#allocation9], 64, 64, 4
    $region25: #{tpu_custom_call.1} parent=1 // pred_fallthru
      _
    // Predicated region
    $region26: #{tpu_custom_call.1} parent=1 // pred_check
      _
    $region27: #{tpu_custom_call.1} parent=1 // pred_check_branch
      %67 = sbr.rel (0) target = $region29
    $region28: #{tpu_custom_call.1} parent=1 // pred_region
      _
    $region29: #{tpu_custom_call.1} parent=1 // pred_fallthru
      _
    // Predicated region
    $region30: #{tpu_custom_call.1} parent=1 // pred_check
      _
    $region31: #{tpu_custom_call.1} parent=1 // pred_check_branch
      %69 = sbr.rel (0) target = $region33
    $region32: #{tpu_custom_call.1} parent=1 // pred_region
      %70 = dma.done [#allocation3], 64
    $region33: #{tpu_custom_call.1} parent=1 // pred_fallthru
      _
    // Predicated region
    $region34: #{tpu_custom_call.1} parent=1 // pred_check
      _
    $region35: #{tpu_custom_call.1} parent=1 // pred_check_branch
      %72 = sbr.rel (0) target = $region37
    $region36: #{tpu_custom_call.1} parent=1 // pred_region
      %73 = dma.done [#allocation6], 1024
    $region37: #{tpu_custom_call.1} parent=1 // pred_fallthru
      _
    // Predicated region
    $region38: #{tpu_custom_call.1} parent=1 // pred_check
      _
    $region39: #{tpu_custom_call.1} parent=1 // pred_check_branch
      %75 = sbr.rel (0) target = $region41
    $region40: #{tpu_custom_call.1} parent=1 // pred_region
      %76 = dma.done [#allocation6], 2048
    $region41: #{tpu_custom_call.1} parent=1 // pred_fallthru
      _
    // Predicated region
    $region42: #{tpu_custom_call.1} parent=1 // pred_check
      _
    $region43: #{tpu_custom_call.1} parent=1 // pred_check_branch
      %78 = sbr.rel (0) target = $region45
    $region44: #{tpu_custom_call.1} parent=1 // pred_region
      %79 = dma.done [#allocation9], 1024
    $region45: #{tpu_custom_call.1} parent=1 // pred_fallthru
      _
    %v81 = vld [vmem:[#allocation2] sm:$0xf]
    %v82 = vld [vmem:[#allocation5] sm:$0xf]
    %v83 = vld [vmem:[#allocation5 + $0x4] sm:$0xf]
    %v84 = vld [vmem:[#allocation5 + $0x8] sm:$0xf]
    %v85 = vld [vmem:[#allocation5 + $0xc] sm:$0xf]
    %v86 = vld [vmem:[#allocation5 + $0x10] sm:$0xf]
    %v87 = vld [vmem:[#allocation5 + $0x14] sm:$0xf]
    %v88 = vld [vmem:[#allocation5 + $0x18] sm:$0xf]
    %v89 = vld [vmem:[#allocation5 + $0x1c] sm:$0xf]
    %v90 = vld [vmem:[#allocation5 + $0x20] sm:$0xf]
    %v91 = vld [vmem:[#allocation5 + $0x24] sm:$0xf]
    %v92 = vld [vmem:[#allocation5 + $0x28] sm:$0xf]
    %v93 = vld [vmem:[#allocation5 + $0x2c] sm:$0xf]
    %v94 = vld [vmem:[#allocation5 + $0x30] sm:$0xf]
    %v95 = vld [vmem:[#allocation5 + $0x34] sm:$0xf]
    %v96 = vld [vmem:[#allocation5 + $0x38] sm:$0xf]
    %v97 = vld [vmem:[#allocation5 + $0x3c] sm:$0xf]
    %v98 = vld [vmem:[%s2] sm:$0x1]
    %v100 = vlaneseq
    %v101 = vshrl.u32 %v100, 7
    %v102 = vsub.s32 0, %v101
    %v103 = vrot.slane %v98, %v102
    %v121 = vunpack.c.l.b16 %v82
    %v122 = vunpack.c.l.b16 %v83
    %v123 = vunpack.c.l.b16 %v84
    %v124 = vunpack.c.l.b16 %v85
    %v125 = vunpack.c.l.b16 %v86
    %v126 = vunpack.c.l.b16 %v87
    %v127 = vunpack.c.l.b16 %v88
    %v128 = vunpack.c.l.b16 %v89
    %v129 = vunpack.c.l.b16 %v90
    %v130 = vunpack.c.l.b16 %v91
    %v131 = vunpack.c.l.b16 %v92
    %v132 = vunpack.c.l.b16 %v93
    %v133 = vunpack.c.l.b16 %v94
    %v134 = vunpack.c.l.b16 %v95
    %v135 = vunpack.c.l.b16 %v96
    %v136 = vunpack.c.l.b16 %v97
    %v137 = vpack.c.b16 %v122, %v121
    %v138 = vpack.c.b16 %v124, %v123
    %v139 = vpack.c.b16 %v126, %v125
    %v140 = vpack.c.b16 %v128, %v127
    %v141 = vpack.c.b16 %v130, %v129
    %v142 = vpack.c.b16 %v132, %v131
    %v143 = vpack.c.b16 %v134, %v133
    %v144 = vpack.c.b16 %v136, %v135
    %153 = vmatprep.subr.bf16.mxu0 0
    %154 = vmatpush1.bf16.msra.mxu0 %v137
    %155 = vmatprep.subr.bf16.mxu0 0
    %156 = vmatpush1.bf16.msra.mxu0 %v138
    %157 = vmatprep.subr.bf16.mxu0 0
    %158 = vmatpush1.bf16.msra.mxu0 %v139
    %159 = vmatprep.subr.bf16.mxu0 0
    %160 = vmatpush1.bf16.msra.mxu0 %v140
    %161 = vmatprep.subr.bf16.mxu0 0
    %162 = vmatpush1.bf16.msra.mxu0 %v141
    %163 = vmatprep.subr.bf16.mxu0 0
    %164 = vmatpush1.bf16.msra.mxu0 %v142
    %165 = vmatprep.subr.bf16.mxu0 0
    %166 = vmatpush1.bf16.msra.mxu0 %v143
    %167 = vmatprep.subr.bf16.mxu0 0
    %168 = vmatpush1.bf16.msra.mxu0 %v144
    %169 = vmatprep.subr.bf16.mxu0 0
    %170 = vmatpush1.bf16.msra.mxu0 0
    %171 = vmatprep.subr.bf16.mxu0 0
    %172 = vmatpush1.bf16.msra.mxu0 0
    %173 = vmatprep.subr.bf16.mxu0 0
    %174 = vmatpush1.bf16.msra.mxu0 0
    %175 = vmatprep.subr.bf16.mxu0 0
    %176 = vmatpush1.bf16.msra.mxu0 0
    %177 = vmatprep.subr.bf16.mxu0 0
    %178 = vmatpush1.bf16.msra.mxu0 0
    %179 = vmatprep.subr.bf16.mxu0 0
    %180 = vmatpush1.bf16.msra.mxu0 0
    %181 = vmatprep.subr.bf16.mxu0 0
    %182 = vmatpush1.bf16.msra.mxu0 0
    %183 = vmatprep.subr.bf16.mxu0 0
    %184 = vmatpush1.bf16.msra.mxu0 0
    %185 = vmatprep.mubr.bf16.mxu0 0
    %186 = vmatmul.mubr.bf16.gmra.mrb[0].mxu0 %v81
    %v187 = vpop.f32.mrb[0].mxu0
    %v188 = vadd.f32 %v103, %v187
    %v189 = vpop.f32.mrb[0].mxu0
    %v190 = vpop.f32.mrb[0].mxu0
    %v191 = vpop.f32.mrb[0].mxu0
    %192 = vdwg.mxu0
    %vm193 = vcmp.ge.f32.partialorder %v188, 0.0
    %v194 = vmul.f32 %v188, 0.01
    %v195 = vsel %vm193, %v188, %v194
    %v196 = vpack.c.bf16 %v195, %v195
    %v197 = vld [vmem:[#allocation7] sm:$0xf]
    %v198 = vld [vmem:[#allocation7 + $0x4] sm:$0xf]
    %v199 = vld [vmem:[#allocation7 + $0x8] sm:$0xf]
    %v200 = vld [vmem:[#allocation7 + $0xc] sm:$0xf]
    %v201 = vld [vmem:[#allocation7 + $0x10] sm:$0xf]
    %v202 = vld [vmem:[#allocation7 + $0x14] sm:$0xf]
    %v203 = vld [vmem:[#allocation7 + $0x18] sm:$0xf]
    %v204 = vld [vmem:[#allocation7 + $0x1c] sm:$0xf]
    %v205 = vld [vmem:[#allocation7 + $0x20] sm:$0xf]
    %v206 = vld [vmem:[#allocation7 + $0x24] sm:$0xf]
    %v207 = vld [vmem:[#allocation7 + $0x28] sm:$0xf]
    %v208 = vld [vmem:[#allocation7 + $0x2c] sm:$0xf]
    %v209 = vld [vmem:[#allocation7 + $0x30] sm:$0xf]
    %v210 = vld [vmem:[#allocation7 + $0x34] sm:$0xf]
    %v211 = vld [vmem:[#allocation7 + $0x38] sm:$0xf]
    %v212 = vld [vmem:[#allocation7 + $0x3c] sm:$0xf]
    %v213 = vld [vmem:[%s4] sm:$0x1]
    %v215 = vlaneseq
    %v216 = vshrl.u32 %v215, 7
    %v217 = vsub.s32 0, %v216
    %v218 = vrot.slane %v213, %v217
    %v236 = vunpack.c.l.b16 %v197
    %v237 = vunpack.c.l.b16 %v198
    %v238 = vunpack.c.l.b16 %v199
    %v239 = vunpack.c.l.b16 %v200
    %v240 = vunpack.c.l.b16 %v201
    %v241 = vunpack.c.l.b16 %v202
    %v242 = vunpack.c.l.b16 %v203
    %v243 = vunpack.c.l.b16 %v204
    %v244 = vunpack.c.l.b16 %v205
    %v245 = vunpack.c.l.b16 %v206
    %v246 = vunpack.c.l.b16 %v207
    %v247 = vunpack.c.l.b16 %v208
    %v248 = vunpack.c.l.b16 %v209
    %v249 = vunpack.c.l.b16 %v210
    %v250 = vunpack.c.l.b16 %v211
    %v251 = vunpack.c.l.b16 %v212
    %v252 = vpack.c.b16 %v237, %v236
    %v253 = vpack.c.b16 %v239, %v238
    %v254 = vpack.c.b16 %v241, %v240
    %v255 = vpack.c.b16 %v243, %v242
    %v256 = vpack.c.b16 %v245, %v244
    %v257 = vpack.c.b16 %v247, %v246
    %v258 = vpack.c.b16 %v249, %v248
    %v259 = vpack.c.b16 %v251, %v250
    %268 = vmatprep.subr.bf16.mxu0 0
    %269 = vmatpush1.bf16.msra.mxu0 %v252
    %270 = vmatprep.subr.bf16.mxu0 0
    %271 = vmatpush1.bf16.msra.mxu0 %v253
    %272 = vmatprep.subr.bf16.mxu0 0
    %273 = vmatpush1.bf16.msra.mxu0 %v254
    %274 = vmatprep.subr.bf16.mxu0 0
    %275 = vmatpush1.bf16.msra.mxu0 %v255
    %276 = vmatprep.subr.bf16.mxu0 0
    %277 = vmatpush1.bf16.msra.mxu0 %v256
    %278 = vmatprep.subr.bf16.mxu0 0
    %279 = vmatpush1.bf16.msra.mxu0 %v257
    %280 = vmatprep.subr.bf16.mxu0 0
    %281 = vmatpush1.bf16.msra.mxu0 %v258
    %282 = vmatprep.subr.bf16.mxu0 0
    %283 = vmatpush1.bf16.msra.mxu0 %v259
    %284 = vmatprep.subr.bf16.mxu0 0
    %285 = vmatpush1.bf16.msra.mxu0 0
    %286 = vmatprep.subr.bf16.mxu0 0
    %287 = vmatpush1.bf16.msra.mxu0 0
    %288 = vmatprep.subr.bf16.mxu0 0
    %289 = vmatpush1.bf16.msra.mxu0 0
    %290 = vmatprep.subr.bf16.mxu0 0
    %291 = vmatpush1.bf16.msra.mxu0 0
    %292 = vmatprep.subr.bf16.mxu0 0
    %293 = vmatpush1.bf16.msra.mxu0 0
    %294 = vmatprep.subr.bf16.mxu0 0
    %295 = vmatpush1.bf16.msra.mxu0 0
    %296 = vmatprep.subr.bf16.mxu0 0
    %297 = vmatpush1.bf16.msra.mxu0 0
    %298 = vmatprep.subr.bf16.mxu0 0
    %299 = vmatpush1.bf16.msra.mxu0 0
    %300 = vmatprep.mubr.bf16.mxu0 0
    %301 = vmatmul.mubr.bf16.gmra.mrb[0].mxu0 %v196
    %v302 = vpop.f32.mrb[0].mxu0
    %v303 = vadd.f32 %v218, %v302
    %v304 = vpop.f32.mrb[0].mxu0
    %v305 = vpop.f32.mrb[0].mxu0
    %v306 = vpop.f32.mrb[0].mxu0
    %307 = vdwg.mxu0
    %vm308 = vcmp.ge.f32.partialorder %v303, 0.0
    %v309 = vmul.f32 %v303, 0.01
    %v310 = vsel %vm308, %v303, %v309
    %v311 = vpack.c.bf16 %v310, %v310
    %s312 = scalar_lea.vmem [#allocation7], 64
    %v313 = vld [vmem:[%s312] sm:$0xf]
    %v314 = vld [vmem:[%s312 + $0x4] sm:$0xf]
    %v315 = vld [vmem:[%s312 + $0x8] sm:$0xf]
    %v316 = vld [vmem:[%s312 + $0xc] sm:$0xf]
    %v317 = vld [vmem:[%s312 + $0x10] sm:$0xf]
    %v318 = vld [vmem:[%s312 + $0x14] sm:$0xf]
    %v319 = vld [vmem:[%s312 + $0x18] sm:$0xf]
    %v320 = vld [vmem:[%s312 + $0x1c] sm:$0xf]
    %v321 = vld [vmem:[%s312 + $0x20] sm:$0xf]
    %v322 = vld [vmem:[%s312 + $0x24] sm:$0xf]
    %v323 = vld [vmem:[%s312 + $0x28] sm:$0xf]
    %v324 = vld [vmem:[%s312 + $0x2c] sm:$0xf]
    %v325 = vld [vmem:[%s312 + $0x30] sm:$0xf]
    %v326 = vld [vmem:[%s312 + $0x34] sm:$0xf]
    %v327 = vld [vmem:[%s312 + $0x38] sm:$0xf]
    %v328 = vld [vmem:[%s312 + $0x3c] sm:$0xf]
    %s329 = scalar_lea.vmem %s4, 1
    %v330 = vld [vmem:[%s329] sm:$0x1]
    %v332 = vlaneseq
    %v333 = vshrl.u32 %v332, 7
    %v334 = vsub.s32 0, %v333
    %v335 = vrot.slane %v330, %v334
    %v353 = vunpack.c.l.b16 %v313
    %v354 = vunpack.c.l.b16 %v314
    %v355 = vunpack.c.l.b16 %v315
    %v356 = vunpack.c.l.b16 %v316
    %v357 = vunpack.c.l.b16 %v317
    %v358 = vunpack.c.l.b16 %v318
    %v359 = vunpack.c.l.b16 %v319
    %v360 = vunpack.c.l.b16 %v320
    %v361 = vunpack.c.l.b16 %v321
    %v362 = vunpack.c.l.b16 %v322
    %v363 = vunpack.c.l.b16 %v323
    %v364 = vunpack.c.l.b16 %v324
    %v365 = vunpack.c.l.b16 %v325
    %v366 = vunpack.c.l.b16 %v326
    %v367 = vunpack.c.l.b16 %v327
    %v368 = vunpack.c.l.b16 %v328
    %v369 = vpack.c.b16 %v354, %v353
    %v370 = vpack.c.b16 %v356, %v355
    %v371 = vpack.c.b16 %v358, %v357
    %v372 = vpack.c.b16 %v360, %v359
    %v373 = vpack.c.b16 %v362, %v361
    %v374 = vpack.c.b16 %v364, %v363
    %v375 = vpack.c.b16 %v366, %v365
    %v376 = vpack.c.b16 %v368, %v367
    %385 = vmatprep.subr.bf16.mxu0 0
    %386 = vmatpush1.bf16.msra.mxu0 %v369
    %387 = vmatprep.subr.bf16.mxu0 0
    %388 = vmatpush1.bf16.msra.mxu0 %v370
    %389 = vmatprep.subr.bf16.mxu0 0
    %390 = vmatpush1.bf16.msra.mxu0 %v371
    %391 = vmatprep.subr.bf16.mxu0 0
    %392 = vmatpush1.bf16.msra.mxu0 %v372
    %393 = vmatprep.subr.bf16.mxu0 0
    %394 = vmatpush1.bf16.msra.mxu0 %v373
    %395 = vmatprep.subr.bf16.mxu0 0
    %396 = vmatpush1.bf16.msra.mxu0 %v374
    %397 = vmatprep.subr.bf16.mxu0 0
    %398 = vmatpush1.bf16.msra.mxu0 %v375
    %399 = vmatprep.subr.bf16.mxu0 0
    %400 = vmatpush1.bf16.msra.mxu0 %v376
    %401 = vmatprep.subr.bf16.mxu0 0
    %402 = vmatpush1.bf16.msra.mxu0 0
    %403 = vmatprep.subr.bf16.mxu0 0
    %404 = vmatpush1.bf16.msra.mxu0 0
    %405 = vmatprep.subr.bf16.mxu0 0
    %406 = vmatpush1.bf16.msra.mxu0 0
    %407 = vmatprep.subr.bf16.mxu0 0
    %408 = vmatpush1.bf16.msra.mxu0 0
    %409 = vmatprep.subr.bf16.mxu0 0
    %410 = vmatpush1.bf16.msra.mxu0 0
    %411 = vmatprep.subr.bf16.mxu0 0
    %412 = vmatpush1.bf16.msra.mxu0 0
    %413 = vmatprep.subr.bf16.mxu0 0
    %414 = vmatpush1.bf16.msra.mxu0 0
    %415 = vmatprep.subr.bf16.mxu0 0
    %416 = vmatpush1.bf16.msra.mxu0 0
    %417 = vmatprep.mubr.bf16.mxu0 0
    %418 = vmatmul.mubr.bf16.gmra.mrb[0].mxu0 %v311
    %v419 = vpop.f32.mrb[0].mxu0
    %v420 = vadd.f32 %v335, %v419
    %v421 = vpop.f32.mrb[0].mxu0
    %v422 = vpop.f32.mrb[0].mxu0
    %v423 = vpop.f32.mrb[0].mxu0
    %424 = vdwg.mxu0
    %vm425 = vcmp.ge.f32.partialorder %v420, 0.0
    %v426 = vmul.f32 %v420, 0.01
    %v427 = vsel %vm425, %v420, %v426
    %v428 = vpack.c.bf16 %v427, %v427
    %v429 = vld [vmem:[#allocation8] sm:$0xf]
    %v430 = vld [vmem:[#allocation8 + $0x4] sm:$0xf]
    %v431 = vld [vmem:[#allocation8 + $0x8] sm:$0xf]
    %v432 = vld [vmem:[#allocation8 + $0xc] sm:$0xf]
    %v433 = vld [vmem:[#allocation8 + $0x10] sm:$0xf]
    %v434 = vld [vmem:[#allocation8 + $0x14] sm:$0xf]
    %v435 = vld [vmem:[#allocation8 + $0x18] sm:$0xf]
    %v436 = vld [vmem:[#allocation8 + $0x1c] sm:$0xf]
    %v437 = vld [vmem:[#allocation8 + $0x20] sm:$0xf]
    %v438 = vld [vmem:[#allocation8 + $0x24] sm:$0xf]
    %v439 = vld [vmem:[#allocation8 + $0x28] sm:$0xf]
    %v440 = vld [vmem:[#allocation8 + $0x2c] sm:$0xf]
    %v441 = vld [vmem:[#allocation8 + $0x30] sm:$0xf]
    %v442 = vld [vmem:[#allocation8 + $0x34] sm:$0xf]
    %v443 = vld [vmem:[#allocation8 + $0x38] sm:$0xf]
    %v444 = vld [vmem:[#allocation8 + $0x3c] sm:$0xf]
    %v445 = vld [vmem:[%s6] sm:$0x1]
    %v447 = vlaneseq
    %v448 = vshrl.u32 %v447, 7
    %v449 = vsub.s32 0, %v448
    %v450 = vrot.slane %v445, %v449
    %v468 = vunpack.c.l.b16 %v429
    %v469 = vunpack.c.l.b16 %v430
    %v470 = vunpack.c.l.b16 %v431
    %v471 = vunpack.c.l.b16 %v432
    %v472 = vunpack.c.l.b16 %v433
    %v473 = vunpack.c.l.b16 %v434
    %v474 = vunpack.c.l.b16 %v435
    %v475 = vunpack.c.l.b16 %v436
    %v476 = vunpack.c.l.b16 %v437
    %v477 = vunpack.c.l.b16 %v438
    %v478 = vunpack.c.l.b16 %v439
    %v479 = vunpack.c.l.b16 %v440
    %v480 = vunpack.c.l.b16 %v441
    %v481 = vunpack.c.l.b16 %v442
    %v482 = vunpack.c.l.b16 %v443
    %v483 = vunpack.c.l.b16 %v444
    %v484 = vpack.c.b16 %v469, %v468
    %v485 = vpack.c.b16 %v471, %v470
    %v486 = vpack.c.b16 %v473, %v472
    %v487 = vpack.c.b16 %v475, %v474
    %v488 = vpack.c.b16 %v477, %v476
    %v489 = vpack.c.b16 %v479, %v478
    %v490 = vpack.c.b16 %v481, %v480
    %v491 = vpack.c.b16 %v483, %v482
    %500 = vmatprep.subr.bf16.mxu0 0
    %501 = vmatpush1.bf16.msra.mxu0 %v484
    %502 = vmatprep.subr.bf16.mxu0 0
    %503 = vmatpush1.bf16.msra.mxu0 %v485
    %504 = vmatprep.subr.bf16.mxu0 0
    %505 = vmatpush1.bf16.msra.mxu0 %v486
    %506 = vmatprep.subr.bf16.mxu0 0
    %507 = vmatpush1.bf16.msra.mxu0 %v487
    %508 = vmatprep.subr.bf16.mxu0 0
    %509 = vmatpush1.bf16.msra.mxu0 %v488
    %510 = vmatprep.subr.bf16.mxu0 0
    %511 = vmatpush1.bf16.msra.mxu0 %v489
    %512 = vmatprep.subr.bf16.mxu0 0
    %513 = vmatpush1.bf16.msra.mxu0 %v490
    %514 = vmatprep.subr.bf16.mxu0 0
    %515 = vmatpush1.bf16.msra.mxu0 %v491
    %516 = vmatprep.subr.bf16.mxu0 0
    %517 = vmatpush1.bf16.msra.mxu0 0
    %518 = vmatprep.subr.bf16.mxu0 0
    %519 = vmatpush1.bf16.msra.mxu0 0
    %520 = vmatprep.subr.bf16.mxu0 0
    %521 = vmatpush1.bf16.msra.mxu0 0
    %522 = vmatprep.subr.bf16.mxu0 0
    %523 = vmatpush1.bf16.msra.mxu0 0
    %524 = vmatprep.subr.bf16.mxu0 0
    %525 = vmatpush1.bf16.msra.mxu0 0
    %526 = vmatprep.subr.bf16.mxu0 0
    %527 = vmatpush1.bf16.msra.mxu0 0
    %528 = vmatprep.subr.bf16.mxu0 0
    %529 = vmatpush1.bf16.msra.mxu0 0
    %530 = vmatprep.subr.bf16.mxu0 0
    %531 = vmatpush1.bf16.msra.mxu0 0
    %532 = vmatprep.mubr.bf16.mxu0 0
    %533 = vmatmul.mubr.bf16.gmra.mrb[0].mxu0 %v428
    %v534 = vpop.f32.mrb[0].mxu0
    %v535 = vadd.f32 %v450, %v534
    %v536 = vpop.f32.mrb[0].mxu0
    %v537 = vpop.f32.mrb[0].mxu0
    %v538 = vpop.f32.mrb[0].mxu0
    %539 = vdwg.mxu0
    %540 = vst [vmem:[#allocation10] sm:$0xff] %v535
    // Predicated region
    $region46: #{tpu_custom_call.1} parent=1 // pred_check
      _
    $region47: #{tpu_custom_call.1} parent=1 // pred_check_branch
      %542 = sbr.rel (0) target = $region49
    $region48: #{tpu_custom_call.1} parent=1 // pred_region
      %s544 = ssub.s32 128, 128
      %545 = vsyncadd [#allocation4], %s544
      %s547 = sshll.u32 [#allocation10], 4
      %s548 = int_to_ptr.vmem [resolvable:$true] %s547
      %550 = dma.vmem_to_hbm [thread:$0]  %s548, 128, %s7, [#allocation4]
    $region49: #{tpu_custom_call.1} parent=1 // pred_fallthru
      _
    // Predicated region
    $region50: #{tpu_custom_call.1} parent=1 // pred_check
      _
    $region51: #{tpu_custom_call.1} parent=1 // pred_check_branch
      %552 = sbr.rel (0) target = $region53
    $region52: #{tpu_custom_call.1} parent=1 // pred_region
      %553 = dma.done [#allocation4], 128
    $region53: #{tpu_custom_call.1} parent=1 // pred_fallthru
      _
    %554 = vsyncpa [#allocation3], 1
    %555 = vsyncpa [#allocation6], 1
    %556 = vsyncpa [#allocation9], 1
    %557 = vsyncpa [#allocation4], 1

</llo_original>
